<compile_context>
chip_gen: v5e
topology: v5e:2x2
jax: 0.10.0
libtpu: 0.0.40
codegen_flags: <defaults>
</compile_context>

<pallas_src>
import math
from functools import partial

import numpy as np
import jax
import jax.numpy as jnp
from jax import lax
from jax.experimental import pallas as pl
from jax.experimental.pallas import tpu as pltpu

EMBED = 32                 # embed_size (small, consistent with the module)
HEADS = 4                  # heads
HEAD_DIM = EMBED // HEADS  # 8
FFN = 4 * EMBED            # forward_expansion * embed_size = 128
EPS = 1e-5                 # nn.LayerNorm default eps
VECW = FFN                 # packed-vector slab width (>= EMBED)


# ----------------------------- kernel helpers -----------------------------
def _layer_norm(x, gamma, beta):
    mu = jnp.mean(x, axis=-1, keepdims=True)
    var = jnp.mean((x - mu) ** 2, axis=-1, keepdims=True)
    return (x - mu) * lax.rsqrt(var + EPS) * gamma + beta


# ------------------------------- the kernel --------------------------------
def decoder_layer_kernel(x_ref, enc_ref, trg_ref, src_ref,
                         wmat_ref, wff1_ref, vecs_ref, o_ref,
                         *, n_batches, seq):
    E, F = EMBED, FFN

    x = x_ref[...]        # (NBLK, E)  decoder activations (whole batches)
    enc = enc_ref[...]    # (NBLK, E)  encoder output (unused numerically; see identity note)
    del enc               # keys/queries are algebraically dead under the reference einsum

    # ---- packed parameters (3 DMAs total) ----
    vec = vecs_ref[...]                      # (10, VECW)
    bo1 = vec[0:1, :E]
    bo2 = vec[1:2, :E]
    g1, be1 = vec[2:3, :E], vec[3:4, :E]
    g2, be2 = vec[4:5, :E], vec[5:6, :E]
    g3, be3 = vec[6:7, :E], vec[7:8, :E]
    bf2 = vec[8:9, :E]
    bf1 = vec[9:10, :F]

    wv1 = wmat_ref[0:E, :]                   # (E, E) block-diag of wv1.T
    wo1 = wmat_ref[E:2 * E, :]               # (E, E) = wo1.T
    wv2 = wmat_ref[2 * E:3 * E, :]           # (E, E) block-diag of wv2.T
    wo2 = wmat_ref[3 * E:4 * E, :]           # (E, E) = wo2.T
    w2 = wmat_ref[4 * E:4 * E + F, :]        # (F, E) = w2.T
    w1 = wff1_ref[...]                       # (E, F) = w1.T

    def batch_colsum(v):
        # per-batch column sum, broadcast back to every row of that batch
        if n_batches == 1:
            s = jnp.sum(v, axis=0, keepdims=True)
            return jnp.broadcast_to(s, v.shape)
        v3 = v.reshape(n_batches, seq, v.shape[-1])
        s = jnp.sum(v3, axis=1, keepdims=True)
        return jnp.broadcast_to(s, v3.shape).reshape(v.shape)

    def row_factor(mask):
        # sum_k softmax(masked scores)[q, k] == 1.0 when the mask row has any nonzero,
        # NaN when the row is fully masked (exp(-inf - (-inf)) in the reference).
        any_keep = jnp.max((mask != 0.0).astype(jnp.float32), axis=-1, keepdims=True)
        return jnp.where(any_keep > 0.0, jnp.float32(1.0), jnp.float32(jnp.nan))

    def attention(values, mask, wv_bd, wo_t, bo):
        # faithful to einsum('nhqk,nlhd->nqhd'): k and l reduced independently, so
        #   out[q, :] = row_factor[q] * (per-batch column sum of the projected values)
        vproj = jnp.dot(values, wv_bd, preferred_element_type=jnp.float32)   # (NBLK, E)
        heads_out = row_factor(mask) * batch_colsum(vproj)                   # (NBLK, E)
        return jnp.dot(heads_out, wo_t, preferred_element_type=jnp.float32) + bo

    # ---- masked self-attention + residual + norm1 (dropout == identity) ----
    a1 = attention(x, trg_ref[...], wv1, wo1, bo1)
    x1 = _layer_norm(a1 + x, g1, be1)

    # ---- encoder-decoder attention: values = x1, keys = queries = enc_out ----
    a2 = attention(x1, src_ref[...], wv2, wo2, bo2)
    x2 = _layer_norm(a2 + x1, g2, be2)

    # ---- feed-forward + residual + norm3 ----
    h = jnp.maximum(jnp.dot(x2, w1, preferred_element_type=jnp.float32) + bf1, 0.0)
    ff = jnp.dot(h, w2, preferred_element_type=jnp.float32) + bf2
    o_ref[...] = _layer_norm(ff + x2, g3, be3).astype(o_ref.dtype)


# ------------------------------ param packing -------------------------------
def _pack_params(P):
    def block_diag_t(w):  # per-head (hd, hd) Linear weight -> (E, E) block-diag of w.T
        return jnp.kron(jnp.eye(HEADS, dtype=jnp.float32), jnp.asarray(w, jnp.float32).T)

    wmat = jnp.concatenate([
        block_diag_t(P['wv1']), P['wo1'].T,
        block_diag_t(P['wv2']), P['wo2'].T,
        P['w2'].T,
    ], axis=0).astype(jnp.float32)                                   # (4E + F, E) = (256, 32)

    wff1 = jnp.asarray(P['w1'].T, jnp.float32)                       # (E, F) = (32, 128)

    def row(v):
        v = jnp.asarray(v, jnp.float32)
        return jnp.pad(v, (0, VECW - v.shape[0]))[None, :]

    vecs = jnp.concatenate([row(P['bo1']), row(P['bo2']),
                            row(P['g1']), row(P['be1']),
                            row(P['g2']), row(P['be2']),
                            row(P['g3']), row(P['be3']),
                            row(P['bf2']), row(P['bf1'])], axis=0)   # (10, 128)
    return wmat, wff1, vecs


# ------------------------------- the wrapper --------------------------------
def decoder_layer(x, enc_out, src_mask, trg_mask, params, *, row_blocks=2):
    B, S, E = x.shape
    Be, Se, _ = enc_out.shape
    assert Be == B and Se == S, "residual adds require enc seq len == dec seq len"
    assert E == EMBED

    N = B * S
    # blocks must hold whole batches and satisfy the (8, 128) sublane rule
    if N % row_blocks or (N // row_blocks) % S or ((N // row_blocks) % 8 and row_blocks != 1):
        row_blocks = 1
    NBLK = N // row_blocks
    BBLK = NBLK // S

    # host-side layout plumbing: flatten activations & masks, pack parameters
    x_flat = x.reshape(N, E)
    enc_flat = enc_out.reshape(N, E)
    trg_flat = trg_mask.reshape(N, S)
    src_flat = src_mask.reshape(N, S)
    wmat, wff1, vecs = _pack_params(params)

    row_spec = lambda shape: pl.BlockSpec((NBLK, shape[1]), lambda g: (g, 0))
    const_spec = lambda arr: pl.BlockSpec(arr.shape, lambda g: (0, 0))

    grid_spec = pltpu.PrefetchScalarGridSpec(
        num_scalar_prefetch=0,
        grid=(row_blocks,),
        in_specs=[row_spec(x_flat.shape), row_spec(enc_flat.shape),
                  row_spec(trg_flat.shape), row_spec(src_flat.shape),
                  const_spec(wmat), const_spec(wff1), const_spec(vecs)],
        out_specs=pl.BlockSpec((NBLK, E), lambda g: (g, 0)),
    )

    out_flat = pl.pallas_call(
        partial(decoder_layer_kernel, n_batches=BBLK, seq=S),
        out_shape=jax.ShapeDtypeStruct((N, E), jnp.float32),
        grid_spec=grid_spec,
        compiler_params=pltpu.CompilerParams(dimension_semantics=("parallel",)),
    )(x_flat, enc_flat, trg_flat, src_flat, wmat, wff1, vecs)

    return out_flat.reshape(B, S, E)


# --------------------------- pure-JAX reference -----------------------------
# Full, un-simplified reproduction of the torch module (including the dead softmax path)
# so the algebraic simplification inside the kernel is verified numerically.
def _attention_ref(values, keys, queries, mask, wv, wk, wq, wo, bo):
    B = queries.shape[0]
    vl, kl, ql = values.shape[1], keys.shape[1], queries.shape[1]
    v = values.reshape(B, vl, HEADS, HEAD_DIM) @ wv.T
    k = keys.reshape(B, kl, HEADS, HEAD_DIM) @ wk.T
    q = queries.reshape(B, ql, HEADS, HEAD_DIM) @ wq.T
    att = jnp.einsum('nqhd,nkhd->nhqk', q, k)
    att = jnp.where(mask[:, None, :, :] == 0, -jnp.inf, att)
    att = jax.nn.softmax(att / (EMBED ** 0.5), axis=3)
    out = jnp.einsum('nhqk,nlhd->nqhd', att, v)       # distinct k/l, as in the source
    out = out.reshape(B, ql, EMBED)
    return out @ wo.T + bo


def _ln_ref(x, g, b):
    mu = jnp.mean(x, axis=-1, keepdims=True)
    var = jnp.mean((x - mu) ** 2, axis=-1, keepdims=True)
    return (x - mu) / jnp.sqrt(var + EPS) * g + b


def decoder_layer_ref(x, enc, src_mask, trg_mask, P):
    a = _attention_ref(x, x, x, trg_mask, P['wv1'], P['wk1'], P['wq1'], P['wo1'], P['bo1'])
    x = _ln_ref(a + x, P['g1'], P['be1'])
    c = _attention_ref(x, enc, enc, src_mask, P['wv2'], P['wk2'], P['wq2'], P['wo2'], P['bo2'])
    x = _ln_ref(c + x, P['g2'], P['be2'])
    h = jax.nn.relu(x @ P['w1'].T + P['bf1'])
    f = h @ P['w2'].T + P['bf2']
    return _ln_ref(f + x, P['g3'], P['be3'])


# ------------------------------ param init ----------------------------------
def init_params(key):
    ks = jax.random.split(key, 14)

    def lin_w(k, out_f, in_f):
        b = 1.0 / math.sqrt(in_f)
        return jax.random.uniform(k, (out_f, in_f), jnp.float32, -b, b)

    def lin_b(k, out_f, in_f):
        b = 1.0 / math.sqrt(in_f)
        return jax.random.uniform(k, (out_f,), jnp.float32, -b, b)

    return {
        'wv1': lin_w(ks[0], HEAD_DIM, HEAD_DIM),
        'wk1': lin_w(ks[1], HEAD_DIM, HEAD_DIM),
        'wq1': lin_w(ks[2], HEAD_DIM, HEAD_DIM),
        'wo1': lin_w(ks[3], EMBED, EMBED), 'bo1': lin_b(ks[4], EMBED, EMBED),
        'wv2': lin_w(ks[5], HEAD_DIM, HEAD_DIM),
        'wk2': lin_w(ks[6], HEAD_DIM, HEAD_DIM),
        'wq2': lin_w(ks[7], HEAD_DIM, HEAD_DIM),
        'wo2': lin_w(ks[8], EMBED, EMBED), 'bo2': lin_b(ks[9], EMBED, EMBED),
        'g1': jnp.ones((EMBED,), jnp.float32), 'be1': jnp.zeros((EMBED,), jnp.float32),
        'g2': jnp.ones((EMBED,), jnp.float32), 'be2': jnp.zeros((EMBED,), jnp.float32),
        'g3': jnp.ones((EMBED,), jnp.float32), 'be3': jnp.zeros((EMBED,), jnp.float32),
        'w1': lin_w(ks[10], FFN, EMBED), 'bf1': lin_b(ks[11], FFN, EMBED),
        'w2': lin_w(ks[12], EMBED, FFN), 'bf2': lin_b(ks[13], EMBED, FFN),
    }


# ---------------------------------- main -------------------------------------
if __name__ == "__main__":
    B, S = 2, 8   # decoder and encoder seq lengths must match (residual adds require it)
    key = jax.random.PRNGKey(0)
    kx, ke, kp = jax.random.split(key, 3)

    x = jax.random.normal(kx, (B, S, EMBED), jnp.float32)
    enc_out = jax.random.normal(ke, (B, S, EMBED), jnp.float32)
    trg_mask = jnp.tile(jnp.tril(jnp.ones((S, S), jnp.float32))[None], (B, 1, 1))
    src_mask = jnp.ones((B, S, S), jnp.float32)

    params = init_params(kp)

    out = decoder_layer(x, enc_out, src_mask, trg_mask, params)
    out = jax.block_until_ready(out)

    ref = decoder_layer_ref(x, enc_out, src_mask, trg_mask, params)
    np.testing.assert_allclose(np.asarray(out), np.asarray(ref), rtol=2e-2, atol=2e-2)

    print("KERNEL_OK")
</pallas_src>

<mosaic_0001>
module attributes {stable_mosaic.version = 11 : i64} {
  func.func @decoder_layer_kernel(%arg0: i32, %arg1: memref<8x32xf32, #tpu.memory_space<vmem>>, %arg2: memref<8x32xf32, #tpu.memory_space<vmem>>, %arg3: memref<8x8xf32, #tpu.memory_space<vmem>>, %arg4: memref<8x8xf32, #tpu.memory_space<vmem>>, %arg5: memref<256x32xf32, #tpu.memory_space<vmem>>, %arg6: memref<32x128xf32, #tpu.memory_space<vmem>>, %arg7: memref<10x128xf32, #tpu.memory_space<vmem>>, %arg8: memref<8x32xf32, #tpu.memory_space<vmem>>) attributes {dimension_semantics = [#tpu.dimension_semantics<parallel>], iteration_bounds = array<i64: 2>, scalar_prefetch = 0 : i64, scratch_operands = 0 : i64, tpu.core_type = #tpu.core_type<tc>, window_params = [{transform_indices = @transform_0, window_bounds = array<i64: 8, 32>}, {transform_indices = @transform_1, window_bounds = array<i64: 8, 32>}, {transform_indices = @transform_2, window_bounds = array<i64: 8, 8>}, {transform_indices = @transform_3, window_bounds = array<i64: 8, 8>}, {pipeline_mode = #tpu.pipeline_mode<synchronous>, transform_indices = @transform_4, window_bounds = array<i64: 256, 32>}, {pipeline_mode = #tpu.pipeline_mode<synchronous>, transform_indices = @transform_5, window_bounds = array<i64: 32, 128>}, {pipeline_mode = #tpu.pipeline_mode<synchronous>, transform_indices = @transform_6, window_bounds = array<i64: 10, 128>}, {transform_indices = @transform_7, window_bounds = array<i64: 8, 32>}]} {
    %c0 = arith.constant 0 : index
    %c0_0 = arith.constant 0 : index
    %0 = vector.load %arg1[%c0, %c0_0] : memref<8x32xf32, #tpu.memory_space<vmem>>, vector<8x32xf32>
    %c0_1 = arith.constant 0 : index
    %c0_2 = arith.constant 0 : index
    %1 = vector.load %arg7[%c0_1, %c0_2] : memref<10x128xf32, #tpu.memory_space<vmem>>, vector<10x128xf32>
    %2 = vector.extract_strided_slice %1 {offsets = [0, 0], sizes = [1, 32], strides = [1, 1]} : vector<10x128xf32> to vector<1x32xf32>
    %3 = vector.extract_strided_slice %1 {offsets = [1, 0], sizes = [1, 32], strides = [1, 1]} : vector<10x128xf32> to vector<1x32xf32>
    %4 = vector.extract_strided_slice %1 {offsets = [2, 0], sizes = [1, 32], strides = [1, 1]} : vector<10x128xf32> to vector<1x32xf32>
    %5 = vector.extract_strided_slice %1 {offsets = [3, 0], sizes = [1, 32], strides = [1, 1]} : vector<10x128xf32> to vector<1x32xf32>
    %6 = vector.extract_strided_slice %1 {offsets = [4, 0], sizes = [1, 32], strides = [1, 1]} : vector<10x128xf32> to vector<1x32xf32>
    %7 = vector.extract_strided_slice %1 {offsets = [5, 0], sizes = [1, 32], strides = [1, 1]} : vector<10x128xf32> to vector<1x32xf32>
    %8 = vector.extract_strided_slice %1 {offsets = [6, 0], sizes = [1, 32], strides = [1, 1]} : vector<10x128xf32> to vector<1x32xf32>
    %9 = vector.extract_strided_slice %1 {offsets = [7, 0], sizes = [1, 32], strides = [1, 1]} : vector<10x128xf32> to vector<1x32xf32>
    %10 = vector.extract_strided_slice %1 {offsets = [8, 0], sizes = [1, 32], strides = [1, 1]} : vector<10x128xf32> to vector<1x32xf32>
    %11 = vector.extract_strided_slice %1 {offsets = [9, 0], sizes = [1, 128], strides = [1, 1]} : vector<10x128xf32> to vector<1x128xf32>
    %c0_3 = arith.constant 0 : index
    %c0_4 = arith.constant 0 : index
    %12 = vector.load %arg5[%c0_3, %c0_4] : memref<256x32xf32, #tpu.memory_space<vmem>>, vector<32x32xf32>
    %c32 = arith.constant 32 : index
    %c0_5 = arith.constant 0 : index
    %13 = vector.load %arg5[%c32, %c0_5] : memref<256x32xf32, #tpu.memory_space<vmem>>, vector<32x32xf32>
    %c64 = arith.constant 64 : index
    %c0_6 = arith.constant 0 : index
    %14 = vector.load %arg5[%c64, %c0_6] : memref<256x32xf32, #tpu.memory_space<vmem>>, vector<32x32xf32>
    %c96 = arith.constant 96 : index
    %c0_7 = arith.constant 0 : index
    %15 = vector.load %arg5[%c96, %c0_7] : memref<256x32xf32, #tpu.memory_space<vmem>>, vector<32x32xf32>
    %c128 = arith.constant 128 : index
    %c0_8 = arith.constant 0 : index
    %16 = vector.load %arg5[%c128, %c0_8] : memref<256x32xf32, #tpu.memory_space<vmem>>, vector<128x32xf32>
    %c0_9 = arith.constant 0 : index
    %c0_10 = arith.constant 0 : index
    %17 = vector.load %arg6[%c0_9, %c0_10] : memref<32x128xf32, #tpu.memory_space<vmem>>, vector<32x128xf32>
    %c0_11 = arith.constant 0 : index
    %c0_12 = arith.constant 0 : index
    %18 = vector.load %arg3[%c0_11, %c0_12] : memref<8x8xf32, #tpu.memory_space<vmem>>, vector<8x8xf32>
    %cst = arith.constant dense<0.000000e+00> : vector<8x32xf32>
    %19 = tpu.matmul %0, %12, %cst {dimension_numbers = #tpu.dot_dimension_numbers<[1], [0], [0], [1], [0, 0, 1, 1], [], []>} : vector<8x32xf32>, vector<32x32xf32>, vector<8x32xf32> -> vector<8x32xf32>
    %cst_13 = arith.constant 0.000000e+00 : f32
    %20 = vector.broadcast %cst_13 : f32 to vector<8x8xf32>
    %21 = arith.cmpf one, %18, %20 : vector<8x8xf32>
    %22 = arith.extui %21 : vector<8x8xi1> to vector<8x8xi32>
    %23 = arith.sitofp %22 : vector<8x8xi32> to vector<8x8xf32>
    %cst_14 = arith.constant dense<0xFF800000> : vector<8xf32>
    %24 = vector.multi_reduction <maximumf>, %23, %cst_14 [1] : vector<8x8xf32> to vector<8xf32>
    %25 = vector.shape_cast %24 : vector<8xf32> to vector<8x1xf32>
    %cst_15 = arith.constant 0.000000e+00 : f32
    %26 = vector.broadcast %cst_15 : f32 to vector<8x1xf32>
    %27 = arith.cmpf ogt, %25, %26 : vector<8x1xf32>
    %cst_16 = arith.constant 1.000000e+00 : f32
    %cst_17 = arith.constant 0x7FC00000 : f32
    %28 = vector.broadcast %cst_16 : f32 to vector<8x1xf32>
    %29 = vector.broadcast %cst_17 : f32 to vector<8x1xf32>
    %30 = arith.select %27, %28, %29 : vector<8x1xi1>, vector<8x1xf32>
    %cst_18 = arith.constant dense<0.000000e+00> : vector<32xf32>
    %31 = vector.multi_reduction <add>, %19, %cst_18 [0] : vector<8x32xf32> to vector<32xf32>
    %32 = vector.shape_cast %31 : vector<32xf32> to vector<1x32xf32>
    %33 = vector.shape_cast %32 : vector<1x32xf32> to vector<1x32xf32>
    %34 = vector.broadcast %33 : vector<1x32xf32> to vector<8x32xf32>
    %35 = vector.broadcast %30 : vector<8x1xf32> to vector<8x32xf32>
    %36 = arith.mulf %35, %34 : vector<8x32xf32>
    %cst_19 = arith.constant dense<0.000000e+00> : vector<8x32xf32>
    %37 = tpu.matmul %36, %13, %cst_19 {dimension_numbers = #tpu.dot_dimension_numbers<[1], [0], [0], [1], [0, 0, 1, 1], [], []>} : vector<8x32xf32>, vector<32x32xf32>, vector<8x32xf32> -> vector<8x32xf32>
    %38 = vector.broadcast %2 : vector<1x32xf32> to vector<8x32xf32>
    %39 = arith.addf %37, %38 : vector<8x32xf32>
    %40 = arith.addf %39, %0 : vector<8x32xf32>
    %cst_20 = arith.constant dense<0.000000e+00> : vector<8xf32>
    %41 = vector.multi_reduction <add>, %40, %cst_20 [1] : vector<8x32xf32> to vector<8xf32>
    %42 = vector.shape_cast %41 : vector<8xf32> to vector<8x1xf32>
    %cst_21 = arith.constant 3.200000e+01 : f32
    %43 = vector.broadcast %cst_21 : f32 to vector<8x1xf32>
    %44 = arith.divf %42, %43 : vector<8x1xf32>
    %45 = vector.broadcast %44 : vector<8x1xf32> to vector<8x32xf32>
    %46 = arith.subf %40, %45 : vector<8x32xf32>
    %47 = arith.mulf %46, %46 : vector<8x32xf32>
    %cst_22 = arith.constant dense<0.000000e+00> : vector<8xf32>
    %48 = vector.multi_reduction <add>, %47, %cst_22 [1] : vector<8x32xf32> to vector<8xf32>
    %49 = vector.shape_cast %48 : vector<8xf32> to vector<8x1xf32>
    %cst_23 = arith.constant 3.200000e+01 : f32
    %50 = vector.broadcast %cst_23 : f32 to vector<8x1xf32>
    %51 = arith.divf %49, %50 : vector<8x1xf32>
    %52 = vector.broadcast %44 : vector<8x1xf32> to vector<8x32xf32>
    %53 = arith.subf %40, %52 : vector<8x32xf32>
    %cst_24 = arith.constant 9.99999974E-6 : f32
    %54 = vector.broadcast %cst_24 : f32 to vector<8x1xf32>
    %55 = arith.addf %51, %54 : vector<8x1xf32>
    %56 = math.rsqrt %55 : vector<8x1xf32>
    %57 = vector.broadcast %56 : vector<8x1xf32> to vector<8x32xf32>
    %58 = arith.mulf %53, %57 : vector<8x32xf32>
    %59 = vector.broadcast %4 : vector<1x32xf32> to vector<8x32xf32>
    %60 = arith.mulf %58, %59 : vector<8x32xf32>
    %61 = vector.broadcast %5 : vector<1x32xf32> to vector<8x32xf32>
    %62 = arith.addf %60, %61 : vector<8x32xf32>
    %c0_25 = arith.constant 0 : index
    %c0_26 = arith.constant 0 : index
    %63 = vector.load %arg4[%c0_25, %c0_26] : memref<8x8xf32, #tpu.memory_space<vmem>>, vector<8x8xf32>
    %cst_27 = arith.constant dense<0.000000e+00> : vector<8x32xf32>
    %64 = tpu.matmul %62, %14, %cst_27 {dimension_numbers = #tpu.dot_dimension_numbers<[1], [0], [0], [1], [0, 0, 1, 1], [], []>} : vector<8x32xf32>, vector<32x32xf32>, vector<8x32xf32> -> vector<8x32xf32>
    %cst_28 = arith.constant 0.000000e+00 : f32
    %65 = vector.broadcast %cst_28 : f32 to vector<8x8xf32>
    %66 = arith.cmpf one, %63, %65 : vector<8x8xf32>
    %67 = arith.extui %66 : vector<8x8xi1> to vector<8x8xi32>
    %68 = arith.sitofp %67 : vector<8x8xi32> to vector<8x8xf32>
    %cst_29 = arith.constant dense<0xFF800000> : vector<8xf32>
    %69 = vector.multi_reduction <maximumf>, %68, %cst_29 [1] : vector<8x8xf32> to vector<8xf32>
    %70 = vector.shape_cast %69 : vector<8xf32> to vector<8x1xf32>
    %cst_30 = arith.constant 0.000000e+00 : f32
    %71 = vector.broadcast %cst_30 : f32 to vector<8x1xf32>
    %72 = arith.cmpf ogt, %70, %71 : vector<8x1xf32>
    %cst_31 = arith.constant 1.000000e+00 : f32
    %cst_32 = arith.constant 0x7FC00000 : f32
    %73 = vector.broadcast %cst_31 : f32 to vector<8x1xf32>
    %74 = vector.broadcast %cst_32 : f32 to vector<8x1xf32>
    %75 = arith.select %72, %73, %74 : vector<8x1xi1>, vector<8x1xf32>
    %cst_33 = arith.constant dense<0.000000e+00> : vector<32xf32>
    %76 = vector.multi_reduction <add>, %64, %cst_33 [0] : vector<8x32xf32> to vector<32xf32>
    %77 = vector.shape_cast %76 : vector<32xf32> to vector<1x32xf32>
    %78 = vector.shape_cast %77 : vector<1x32xf32> to vector<1x32xf32>
    %79 = vector.broadcast %78 : vector<1x32xf32> to vector<8x32xf32>
    %80 = vector.broadcast %75 : vector<8x1xf32> to vector<8x32xf32>
    %81 = arith.mulf %80, %79 : vector<8x32xf32>
    %cst_34 = arith.constant dense<0.000000e+00> : vector<8x32xf32>
    %82 = tpu.matmul %81, %15, %cst_34 {dimension_numbers = #tpu.dot_dimension_numbers<[1], [0], [0], [1], [0, 0, 1, 1], [], []>} : vector<8x32xf32>, vector<32x32xf32>, vector<8x32xf32> -> vector<8x32xf32>
    %83 = vector.broadcast %3 : vector<1x32xf32> to vector<8x32xf32>
    %84 = arith.addf %82, %83 : vector<8x32xf32>
    %85 = arith.addf %84, %62 : vector<8x32xf32>
    %cst_35 = arith.constant dense<0.000000e+00> : vector<8xf32>
    %86 = vector.multi_reduction <add>, %85, %cst_35 [1] : vector<8x32xf32> to vector<8xf32>
    %87 = vector.shape_cast %86 : vector<8xf32> to vector<8x1xf32>
    %cst_36 = arith.constant 3.200000e+01 : f32
    %88 = vector.broadcast %cst_36 : f32 to vector<8x1xf32>
    %89 = arith.divf %87, %88 : vector<8x1xf32>
    %90 = vector.broadcast %89 : vector<8x1xf32> to vector<8x32xf32>
    %91 = arith.subf %85, %90 : vector<8x32xf32>
    %92 = arith.mulf %91, %91 : vector<8x32xf32>
    %cst_37 = arith.constant dense<0.000000e+00> : vector<8xf32>
    %93 = vector.multi_reduction <add>, %92, %cst_37 [1] : vector<8x32xf32> to vector<8xf32>
    %94 = vector.shape_cast %93 : vector<8xf32> to vector<8x1xf32>
    %cst_38 = arith.constant 3.200000e+01 : f32
    %95 = vector.broadcast %cst_38 : f32 to vector<8x1xf32>
    %96 = arith.divf %94, %95 : vector<8x1xf32>
    %97 = vector.broadcast %89 : vector<8x1xf32> to vector<8x32xf32>
    %98 = arith.subf %85, %97 : vector<8x32xf32>
    %cst_39 = arith.constant 9.99999974E-6 : f32
    %99 = vector.broadcast %cst_39 : f32 to vector<8x1xf32>
    %100 = arith.addf %96, %99 : vector<8x1xf32>
    %101 = math.rsqrt %100 : vector<8x1xf32>
    %102 = vector.broadcast %101 : vector<8x1xf32> to vector<8x32xf32>
    %103 = arith.mulf %98, %102 : vector<8x32xf32>
    %104 = vector.broadcast %6 : vector<1x32xf32> to vector<8x32xf32>
    %105 = arith.mulf %103, %104 : vector<8x32xf32>
    %106 = vector.broadcast %7 : vector<1x32xf32> to vector<8x32xf32>
    %107 = arith.addf %105, %106 : vector<8x32xf32>
    %cst_40 = arith.constant dense<0.000000e+00> : vector<8x128xf32>
    %108 = tpu.matmul %107, %17, %cst_40 {dimension_numbers = #tpu.dot_dimension_numbers<[1], [0], [0], [1], [0, 0, 1, 1], [], []>} : vector<8x32xf32>, vector<32x128xf32>, vector<8x128xf32> -> vector<8x128xf32>
    %109 = vector.broadcast %11 : vector<1x128xf32> to vector<8x128xf32>
    %110 = arith.addf %108, %109 : vector<8x128xf32>
    %cst_41 = arith.constant 0.000000e+00 : f32
    %111 = vector.broadcast %cst_41 : f32 to vector<8x128xf32>
    %112 = arith.maximumf %110, %111 : vector<8x128xf32>
    %cst_42 = arith.constant dense<0.000000e+00> : vector<8x32xf32>
    %113 = tpu.matmul %112, %16, %cst_42 {dimension_numbers = #tpu.dot_dimension_numbers<[1], [0], [0], [1], [0, 0, 1, 1], [], []>} : vector<8x128xf32>, vector<128x32xf32>, vector<8x32xf32> -> vector<8x32xf32>
    %114 = vector.broadcast %10 : vector<1x32xf32> to vector<8x32xf32>
    %115 = arith.addf %113, %114 : vector<8x32xf32>
    %116 = arith.addf %115, %107 : vector<8x32xf32>
    %cst_43 = arith.constant dense<0.000000e+00> : vector<8xf32>
    %117 = vector.multi_reduction <add>, %116, %cst_43 [1] : vector<8x32xf32> to vector<8xf32>
    %118 = vector.shape_cast %117 : vector<8xf32> to vector<8x1xf32>
    %cst_44 = arith.constant 3.200000e+01 : f32
    %119 = vector.broadcast %cst_44 : f32 to vector<8x1xf32>
    %120 = arith.divf %118, %119 : vector<8x1xf32>
    %121 = vector.broadcast %120 : vector<8x1xf32> to vector<8x32xf32>
    %122 = arith.subf %116, %121 : vector<8x32xf32>
    %123 = arith.mulf %122, %122 : vector<8x32xf32>
    %cst_45 = arith.constant dense<0.000000e+00> : vector<8xf32>
    %124 = vector.multi_reduction <add>, %123, %cst_45 [1] : vector<8x32xf32> to vector<8xf32>
    %125 = vector.shape_cast %124 : vector<8xf32> to vector<8x1xf32>
    %cst_46 = arith.constant 3.200000e+01 : f32
    %126 = vector.broadcast %cst_46 : f32 to vector<8x1xf32>
    %127 = arith.divf %125, %126 : vector<8x1xf32>
    %128 = vector.broadcast %120 : vector<8x1xf32> to vector<8x32xf32>
    %129 = arith.subf %116, %128 : vector<8x32xf32>
    %cst_47 = arith.constant 9.99999974E-6 : f32
    %130 = vector.broadcast %cst_47 : f32 to vector<8x1xf32>
    %131 = arith.addf %127, %130 : vector<8x1xf32>
    %132 = math.rsqrt %131 : vector<8x1xf32>
    %133 = vector.broadcast %132 : vector<8x1xf32> to vector<8x32xf32>
    %134 = arith.mulf %129, %133 : vector<8x32xf32>
    %135 = vector.broadcast %8 : vector<1x32xf32> to vector<8x32xf32>
    %136 = arith.mulf %134, %135 : vector<8x32xf32>
    %137 = vector.broadcast %9 : vector<1x32xf32> to vector<8x32xf32>
    %138 = arith.addf %136, %137 : vector<8x32xf32>
    %c0_48 = arith.constant 0 : index
    %c0_49 = arith.constant 0 : index
    %139 = vector.load %arg8[%c0_48, %c0_49] : memref<8x32xf32, #tpu.memory_space<vmem>>, vector<8x32xf32>
    tpu.vector_store %arg8[%c0_48, %c0_49], %138 {strides = array<i32>} : memref<8x32xf32, #tpu.memory_space<vmem>>, vector<8x32xf32>,
    return
  }
  func.func @transform_0(%arg0: i32) -> (i32, i32) {
    %c0_i32 = arith.constant 0 : i32
    %c0_i32_0 = arith.constant 0 : i32
    return %arg0, %c0_i32 : i32, i32
  }
  func.func @transform_1(%arg0: i32) -> (i32, i32) {
    %c0_i32 = arith.constant 0 : i32
    %c0_i32_0 = arith.constant 0 : i32
    return %arg0, %c0_i32 : i32, i32
  }
  func.func @transform_2(%arg0: i32) -> (i32, i32) {
    %c0_i32 = arith.constant 0 : i32
    %c0_i32_0 = arith.constant 0 : i32
    return %arg0, %c0_i32 : i32, i32
  }
  func.func @transform_3(%arg0: i32) -> (i32, i32) {
    %c0_i32 = arith.constant 0 : i32
    %c0_i32_0 = arith.constant 0 : i32
    return %arg0, %c0_i32 : i32, i32
  }
  func.func @transform_4(%arg0: i32) -> (i32, i32) {
    %c0_i32 = arith.constant 0 : i32
    %c0_i32_0 = arith.constant 0 : i32
    %c0_i32_1 = arith.constant 0 : i32
    return %c0_i32, %c0_i32_0 : i32, i32
  }
  func.func @transform_5(%arg0: i32) -> (i32, i32) {
    %c0_i32 = arith.constant 0 : i32
    %c0_i32_0 = arith.constant 0 : i32
    %c0_i32_1 = arith.constant 0 : i32
    return %c0_i32, %c0_i32_0 : i32, i32
  }
  func.func @transform_6(%arg0: i32) -> (i32, i32) {
    %c0_i32 = arith.constant 0 : i32
    %c0_i32_0 = arith.constant 0 : i32
    %c0_i32_1 = arith.constant 0 : i32
    return %c0_i32, %c0_i32_0 : i32, i32
  }
  func.func @transform_7(%arg0: i32) -> (i32, i32) {
    %c0_i32 = arith.constant 0 : i32
    %c0_i32_0 = arith.constant 0 : i32
    return %arg0, %c0_i32 : i32, i32
  }
}

</mosaic_0001>

<llo_original>
// kernel: tpu_custom_call.1
$region0: #{tpu_custom_call.1}
  #allocation0 [shape = 'u32[]', space=smem, size = 0x4, offset = 0x4, fixed_abs, tag = 'smem constant byte address 0x4 - core index']
  #allocation1 [shape = 'u32[72,128]{1,0:T(1,128)}', space=vmem, size = 0x9000, scoped, tag = 'internal scratch']
  %s0 = inlined_call_operand.vmem [shape: f32[16,32], index: 0, kind: input, shape index: {}]
  %s1 = inlined_call_operand.vmem [shape: f32[16,32], index: 1, kind: input, shape index: {}]
  %s2 = inlined_call_operand.vmem [shape: f32[16,8], index: 2, kind: input, shape index: {}]
  %s3 = inlined_call_operand.vmem [shape: f32[16,8], index: 3, kind: input, shape index: {}]
  %s4 = inlined_call_operand.vmem [shape: f32[256,32], index: 4, kind: input, shape index: {}]
  %s5 = inlined_call_operand.vmem [shape: f32[32,128], index: 5, kind: input, shape index: {}]
  %s6 = inlined_call_operand.vmem [shape: f32[10,128], index: 6, kind: input, shape index: {}]
  %s7 = inlined_call_operand.hbm [shape: f32[16,32], index: 7, kind: output, shape index: {}]
  %s8 = sld [smem:[#allocation0]]
  $region61: #{tpu_custom_call.1} parent=0
    _
  %s10 = ssub.s32 1, %s8
  %s11 = scalar_select 0, %s10, %s8
  $region1: #{tpu_custom_call.1} parent=0
    #allocation2 [shape = 'u8[8192]{0}', space=vmem, size = 0x2000, scoped, tag = 'output window, operand 0']
    #allocation3 [shape = 's32[2]{0}', space=sflag, size = 0x8, scoped, tag = 'scoped memory for tpu_custom_call.1']
    %12 = vsyncpa [#allocation3], 0
    %s13 = scalar_lea.sflag [#allocation3], 1
    %14 = vsyncpa %s13, 0
    loop: start=0, step=1, limit=4
    $region2: #{tpu_custom_call.1} parent=1 // loop_pre_header
      _
    $region3: #{tpu_custom_call.1} parent=1 // loop_header
      %s16 = sphi 0, %s20
      %p17 = scmp.ge.s32.totalorder %s16, 4
      %s26 = sphi 0, %s28
      %s29 = sphi 0, %s26
      %s30 = sphi 0, %s29
      %s46 = sphi 0, %s30
      %s52 = sphi 0, %s54
      %s55 = sphi 0, %s52
      %s56 = sphi 0, %s55
      %s72 = sphi 0, %s56
      %s78 = sphi 0, %s80
      %s81 = sphi 0, %s78
      %s82 = sphi 0, %s81
      %s98 = sphi 0, %s82
      %s104 = sphi 0, %s106
      %s107 = sphi 0, %s104
      %s108 = sphi 0, %s107
      %s124 = sphi 0, %s108
      %s128 = sphi 0, %s128
      %s130 = sphi 0, %s128
      %s131 = sphi 0, %s130
      %s145 = sphi 0, %s131
      %s149 = sphi 0, %s149
      %s151 = sphi 0, %s149
      %s152 = sphi 0, %s151
      %s166 = sphi 0, %s152
      %s170 = sphi 0, %s170
      %s172 = sphi 0, %s170
      %s173 = sphi 0, %s172
      %s187 = sphi 0, %s173
      %s193 = sphi 0, %s195
      %s196 = sphi 0, %s193
      %s197 = sphi 0, %s196
      %s213 = sphi 0, %s197
    $region4: #{tpu_custom_call.1} parent=1 // loop_header_branch
      %19 = sbr.rel (%p17) target = $region8
    $region5: #{tpu_custom_call.1} parent=1 // loop_body
      %s21 = ssub.s32 %s16, 1
      %s22 = ssub.s32 %s16, 2
      %s23 = sadd.s32 %s16, 1
      %s24 = ssub.s32 %s16, %s23
      %p25 = scmp.eq.s32.totalorder %s24, 0
      %s27 = sadd.s32 %s26, 1
      %s28 = scalar_select %p25, %s26, %s27
      %p31 = pneg %p25
      %p32 = scmp.eq.s32.totalorder %s16, 1
      %p33 = por %p31, %p32
      %p34 = scmp.ne.s32.totalorder %s26, %s29
      %p35 = scmp.eq.s32.totalorder %s16, 0
      %p36 = por %p34, %p35
      %p37 = scmp.ne.s32.totalorder %s26, %s29
      %p38 = scmp.eq.s32.totalorder %s21, 1
      %p39 = por %p37, %p38
      %p40 = scmp.ne.s32.totalorder %s29, %s30
      %p41 = scmp.eq.s32.totalorder %s21, 0
      %p42 = por %p40, %p41
      %p43 = scmp.ne.s32.totalorder %s29, %s30
      %p44 = scmp.eq.s32.totalorder %s22, 1
      %p45 = por %p43, %p44
      %p47 = scmp.ne.s32.totalorder %s30, %s46
      %p48 = scmp.eq.s32.totalorder %s22, 0
      %p49 = por %p47, %p48
      %s50 = ssub.s32 %s16, %s23
      %p51 = scmp.eq.s32.totalorder %s50, 0
      %s53 = sadd.s32 %s52, 1
      %s54 = scalar_select %p51, %s52, %s53
      %p57 = pneg %p51
      %p58 = scmp.eq.s32.totalorder %s16, 1
      %p59 = por %p57, %p58
      %p60 = scmp.ne.s32.totalorder %s52, %s55
      %p61 = scmp.eq.s32.totalorder %s16, 0
      %p62 = por %p60, %p61
      %p63 = scmp.ne.s32.totalorder %s52, %s55
      %p64 = scmp.eq.s32.totalorder %s21, 1
      %p65 = por %p63, %p64
      %p66 = scmp.ne.s32.totalorder %s55, %s56
      %p67 = scmp.eq.s32.totalorder %s21, 0
      %p68 = por %p66, %p67
      %p69 = scmp.ne.s32.totalorder %s55, %s56
      %p70 = scmp.eq.s32.totalorder %s22, 1
      %p71 = por %p69, %p70
      %p73 = scmp.ne.s32.totalorder %s56, %s72
      %p74 = scmp.eq.s32.totalorder %s22, 0
      %p75 = por %p73, %p74
      %s76 = ssub.s32 %s16, %s23
      %p77 = scmp.eq.s32.totalorder %s76, 0
      %s79 = sadd.s32 %s78, 1
      %s80 = scalar_select %p77, %s78, %s79
      %p83 = pneg %p77
      %p84 = scmp.eq.s32.totalorder %s16, 1
      %p85 = por %p83, %p84
      %p86 = scmp.ne.s32.totalorder %s78, %s81
      %p87 = scmp.eq.s32.totalorder %s16, 0
      %p88 = por %p86, %p87
      %p89 = scmp.ne.s32.totalorder %s78, %s81
      %p90 = scmp.eq.s32.totalorder %s21, 1
      %p91 = por %p89, %p90
      %p92 = scmp.ne.s32.totalorder %s81, %s82
      %p93 = scmp.eq.s32.totalorder %s21, 0
      %p94 = por %p92, %p93
      %p95 = scmp.ne.s32.totalorder %s81, %s82
      %p96 = scmp.eq.s32.totalorder %s22, 1
      %p97 = por %p95, %p96
      %p99 = scmp.ne.s32.totalorder %s82, %s98
      %p100 = scmp.eq.s32.totalorder %s22, 0
      %p101 = por %p99, %p100
      %s102 = ssub.s32 %s16, %s23
      %p103 = scmp.eq.s32.totalorder %s102, 0
      %s105 = sadd.s32 %s104, 1
      %s106 = scalar_select %p103, %s104, %s105
      %p109 = pneg %p103
      %p110 = scmp.eq.s32.totalorder %s16, 1
      %p111 = por %p109, %p110
      %p112 = scmp.ne.s32.totalorder %s104, %s107
      %p113 = scmp.eq.s32.totalorder %s16, 0
      %p114 = por %p112, %p113
      %p115 = scmp.ne.s32.totalorder %s104, %s107
      %p116 = scmp.eq.s32.totalorder %s21, 1
      %p117 = por %p115, %p116
      %p118 = scmp.ne.s32.totalorder %s107, %s108
      %p119 = scmp.eq.s32.totalorder %s21, 0
      %p120 = por %p118, %p119
      %p121 = scmp.ne.s32.totalorder %s107, %s108
      %p122 = scmp.eq.s32.totalorder %s22, 1
      %p123 = por %p121, %p122
      %p125 = scmp.ne.s32.totalorder %s108, %s124
      %p126 = scmp.eq.s32.totalorder %s22, 0
      %p127 = por %p125, %p126
      %s129 = sadd.s32 %s128, 1
      %p132 = scmp.eq.s32.totalorder %s16, 1
      %p133 = scmp.ne.s32.totalorder %s128, %s130
      %p134 = scmp.eq.s32.totalorder %s16, 0
      %p135 = por %p133, %p134
      %p136 = scmp.ne.s32.totalorder %s128, %s130
      %p137 = scmp.eq.s32.totalorder %s21, 1
      %p138 = por %p136, %p137
      %p139 = scmp.ne.s32.totalorder %s130, %s131
      %p140 = scmp.eq.s32.totalorder %s21, 0
      %p141 = por %p139, %p140
      %p142 = scmp.ne.s32.totalorder %s130, %s131
      %p143 = scmp.eq.s32.totalorder %s22, 1
      %p144 = por %p142, %p143
      %p146 = scmp.ne.s32.totalorder %s131, %s145
      %p147 = scmp.eq.s32.totalorder %s22, 0
      %p148 = por %p146, %p147
      %s150 = sadd.s32 %s149, 1
      %p153 = scmp.eq.s32.totalorder %s16, 1
      %p154 = scmp.ne.s32.totalorder %s149, %s151
      %p155 = scmp.eq.s32.totalorder %s16, 0
      %p156 = por %p154, %p155
      %p157 = scmp.ne.s32.totalorder %s149, %s151
      %p158 = scmp.eq.s32.totalorder %s21, 1
      %p159 = por %p157, %p158
      %p160 = scmp.ne.s32.totalorder %s151, %s152
      %p161 = scmp.eq.s32.totalorder %s21, 0
      %p162 = por %p160, %p161
      %p163 = scmp.ne.s32.totalorder %s151, %s152
      %p164 = scmp.eq.s32.totalorder %s22, 1
      %p165 = por %p163, %p164
      %p167 = scmp.ne.s32.totalorder %s152, %s166
      %p168 = scmp.eq.s32.totalorder %s22, 0
      %p169 = por %p167, %p168
      %s171 = sadd.s32 %s170, 1
      %p174 = scmp.eq.s32.totalorder %s16, 1
      %p175 = scmp.ne.s32.totalorder %s170, %s172
      %p176 = scmp.eq.s32.totalorder %s16, 0
      %p177 = por %p175, %p176
      %p178 = scmp.ne.s32.totalorder %s170, %s172
      %p179 = scmp.eq.s32.totalorder %s21, 1
      %p180 = por %p178, %p179
      %p181 = scmp.ne.s32.totalorder %s172, %s173
      %p182 = scmp.eq.s32.totalorder %s21, 0
      %p183 = por %p181, %p182
      %p184 = scmp.ne.s32.totalorder %s172, %s173
      %p185 = scmp.eq.s32.totalorder %s22, 1
      %p186 = por %p184, %p185
      %p188 = scmp.ne.s32.totalorder %s173, %s187
      %p189 = scmp.eq.s32.totalorder %s22, 0
      %p190 = por %p188, %p189
      %s191 = ssub.s32 %s16, %s23
      %p192 = scmp.eq.s32.totalorder %s191, 0
      %s194 = sadd.s32 %s193, 1
      %s195 = scalar_select %p192, %s193, %s194
      %p198 = pneg %p192
      %p199 = scmp.eq.s32.totalorder %s16, 1
      %p200 = por %p198, %p199
      %p201 = scmp.ne.s32.totalorder %s193, %s196
      %p202 = scmp.eq.s32.totalorder %s16, 0
      %p203 = por %p201, %p202
      %p204 = scmp.ne.s32.totalorder %s193, %s196
      %p205 = scmp.eq.s32.totalorder %s21, 1
      %p206 = por %p204, %p205
      %p207 = scmp.ne.s32.totalorder %s196, %s197
      %p208 = scmp.eq.s32.totalorder %s21, 0
      %p209 = por %p207, %p208
      %p210 = scmp.ne.s32.totalorder %s196, %s197
      %p211 = scmp.eq.s32.totalorder %s22, 1
      %p212 = por %p210, %p211
      %p214 = scmp.ne.s32.totalorder %s197, %s213
      %p215 = scmp.eq.s32.totalorder %s22, 0
      %p216 = por %p214, %p215
      %p217 = scmp.le.s32.totalorder 1, %s16
      %p218 = scmp.lt.s32.totalorder %s16, 3
      %p219 = pnand %p217, %p218
      %p220 = pneg %p219
      // Predicated region
      $region9: #{tpu_custom_call.1} parent=5 // pred_check
        _
      $region10: #{tpu_custom_call.1} parent=5 // pred_check_branch
        %222 = sbr.rel (%p219) target = $region12
      $region11: #{tpu_custom_call.1} parent=5 // pred_region
        %s223 = ssub.s32 %s16, 1
        // Predicated region
        $region13: #{tpu_custom_call.1} parent=11 // pred_check
          %p224 = pneg %p141
        $region14: #{tpu_custom_call.1} parent=11 // pred_check_branch
          %226 = sbr.rel (%p224) target = $region16
        $region15: #{tpu_custom_call.1} parent=11 // pred_region
          _
        $region16: #{tpu_custom_call.1} parent=11 // pred_fallthru
          _
        // Predicated region
        $region17: #{tpu_custom_call.1} parent=11 // pred_check
          %p227 = pneg %p162
        $region18: #{tpu_custom_call.1} parent=11 // pred_check_branch
          %229 = sbr.rel (%p227) target = $region20
        $region19: #{tpu_custom_call.1} parent=11 // pred_region
          _
        $region20: #{tpu_custom_call.1} parent=11 // pred_fallthru
          _
        // Predicated region
        $region21: #{tpu_custom_call.1} parent=11 // pred_check
          %p230 = pneg %p183
        $region22: #{tpu_custom_call.1} parent=11 // pred_check_branch
          %232 = sbr.rel (%p230) target = $region24
        $region23: #{tpu_custom_call.1} parent=11 // pred_region
          _
        $region24: #{tpu_custom_call.1} parent=11 // pred_fallthru
          _
      $region12: #{tpu_custom_call.1} parent=5 // pred_fallthru
        _
      %p233 = scmp.lt.s32.totalorder %s16, 2
      // Predicated region
      $region25: #{tpu_custom_call.1} parent=5 // pred_check
        %p234 = pneg %p233
      $region26: #{tpu_custom_call.1} parent=5 // pred_check_branch
        %236 = sbr.rel (%p234) target = $region28
      $region27: #{tpu_custom_call.1} parent=5 // pred_region
        // Predicated region
        $region29: #{tpu_custom_call.1} parent=27 // pred_check
          %p237 = pneg %p36
        $region30: #{tpu_custom_call.1} parent=27 // pred_check_branch
          %239 = sbr.rel (%p237) target = $region32
        $region31: #{tpu_custom_call.1} parent=27 // pred_region
          %p240 = scmp.lt.s32.totalorder %s16, 1
          %s241 = scalar_select %p240, %s16, 1
          %s242 = smul.addr %s241, 8
          %s243 = scalar_lea.vmem %s0, %s242
        $region32: #{tpu_custom_call.1} parent=27 // pred_fallthru
          _
        // Predicated region
        $region33: #{tpu_custom_call.1} parent=27 // pred_check
          %p244 = pneg %p62
        $region34: #{tpu_custom_call.1} parent=27 // pred_check_branch
          %246 = sbr.rel (%p244) target = $region36
        $region35: #{tpu_custom_call.1} parent=27 // pred_region
          %p247 = scmp.lt.s32.totalorder %s16, 1
          %s248 = scalar_select %p247, %s16, 1
          %s249 = smul.addr %s248, 8
          %s250 = scalar_lea.vmem %s1, %s249
        $region36: #{tpu_custom_call.1} parent=27 // pred_fallthru
          _
        // Predicated region
        $region37: #{tpu_custom_call.1} parent=27 // pred_check
          %p251 = pneg %p88
        $region38: #{tpu_custom_call.1} parent=27 // pred_check_branch
          %253 = sbr.rel (%p251) target = $region40
        $region39: #{tpu_custom_call.1} parent=27 // pred_region
          %p254 = scmp.lt.s32.totalorder %s16, 1
          %s255 = scalar_select %p254, %s16, 1
          %s256 = smul.addr %s255, 8
          %s257 = scalar_lea.vmem %s2, %s256
        $region40: #{tpu_custom_call.1} parent=27 // pred_fallthru
          _
        // Predicated region
        $region41: #{tpu_custom_call.1} parent=27 // pred_check
          %p258 = pneg %p114
        $region42: #{tpu_custom_call.1} parent=27 // pred_check_branch
          %260 = sbr.rel (%p258) target = $region44
        $region43: #{tpu_custom_call.1} parent=27 // pred_region
          %p261 = scmp.lt.s32.totalorder %s16, 1
          %s262 = scalar_select %p261, %s16, 1
          %s263 = smul.addr %s262, 8
          %s264 = scalar_lea.vmem %s3, %s263
        $region44: #{tpu_custom_call.1} parent=27 // pred_fallthru
          _
      $region28: #{tpu_custom_call.1} parent=5 // pred_fallthru
        _
      %p265 = scmp.le.s32.totalorder 1, %s16
      %p266 = scmp.lt.s32.totalorder %s16, 3
      %p267 = pnand %p265, %p266
      %p268 = pneg %p267
      // Predicated region
      $region45: #{tpu_custom_call.1} parent=5 // pred_check
        _
      $region46: #{tpu_custom_call.1} parent=5 // pred_check_branch
        %270 = sbr.rel (%p267) target = $region48
      $region47: #{tpu_custom_call.1} parent=5 // pred_region
        %s271 = ssub.s32 %s16, 1
        %p272 = scmp.lt.s32.totalorder %s21, 1
        %s273 = scalar_select %p272, %s21, 1
        %s274 = smul.addr %s273, 8
        %s275 = scalar_lea.vmem %s0, %s274
        %p276 = pneg %p42
        %p277 = pneg %p39
        %p278 = scmp.lt.s32.totalorder %s21, 1
        %s279 = scalar_select %p278, %s21, 1
        %s280 = smul.addr %s279, 8
        %s281 = scalar_lea.vmem %s1, %s280
        %p282 = pneg %p68
        %p283 = pneg %p65
        %p284 = scmp.lt.s32.totalorder %s21, 1
        %s285 = scalar_select %p284, %s21, 1
        %s286 = smul.addr %s285, 8
        %s287 = scalar_lea.vmem %s2, %s286
        %p288 = pneg %p94
        %p289 = pneg %p91
        %p290 = scmp.lt.s32.totalorder %s21, 1
        %s291 = scalar_select %p290, %s21, 1
        %s292 = smul.addr %s291, 8
        %s293 = scalar_lea.vmem %s3, %s292
        %p294 = pneg %p120
        %p295 = pneg %p117
        %p296 = pneg %p141
        %p297 = pneg %p138
        %p298 = pneg %p162
        %p299 = pneg %p159
        %p300 = pneg %p183
        %p301 = pneg %p180
        %p302 = pneg %p209
        %p303 = pneg %p206
        %s304 = sand.u32 %s196, 1
        %s305 = scalar_lea.sflag [#allocation3], %s304
        %s306 = sand.u32 %s196, 1
        %s307 = smul.addr %s306, 8
        %s308 = scalar_lea.vmem [#allocation2], %s307
        %p309 = scmp.lt.s32.totalorder %s21, 1
        %s310 = scalar_select %p309, %s21, 1
        %s311 = smul.addr %s310, 8
        %s312 = scalar_lea.vmem %s0, %s311
        %p313 = scmp.lt.s32.totalorder %s21, 1
        %s314 = scalar_select %p313, %s21, 1
        %s315 = smul.addr %s314, 8
        %s316 = scalar_lea.vmem %s1, %s315
        %p317 = scmp.lt.s32.totalorder %s21, 1
        %s318 = scalar_select %p317, %s21, 1
        %s319 = smul.addr %s318, 8
        %s320 = scalar_lea.vmem %s2, %s319
        %p321 = scmp.lt.s32.totalorder %s21, 1
        %s322 = scalar_select %p321, %s21, 1
        %s323 = smul.addr %s322, 8
        %s324 = scalar_lea.vmem %s3, %s323
        %v325 = vld [vmem:[%s312] sm:$0xff]
        %v326 = vld [vmem:[%s6] sm:$0xff]
        %v327 = vld [vmem:[%s6 + $0x8] sm:$0x3]
        %v328 = vld [vmem:[%s4] sm:$0xff]
        %v329 = vld [vmem:[%s4 + $0x8] sm:$0xff]
        %v330 = vld [vmem:[%s4 + $0x10] sm:$0xff]
        %v331 = vld [vmem:[%s4 + $0x18] sm:$0xff]
        %v332 = vld [vmem:[%s4 + $0x20] sm:$0xff]
        %v333 = vld [vmem:[%s4 + $0x28] sm:$0xff]
        %v334 = vld [vmem:[%s4 + $0x30] sm:$0xff]
        %v335 = vld [vmem:[%s4 + $0x38] sm:$0xff]
        %v336 = vld [vmem:[%s4 + $0x40] sm:$0xff]
        %v337 = vld [vmem:[%s4 + $0x48] sm:$0xff]
        %v338 = vld [vmem:[%s4 + $0x50] sm:$0xff]
        %v339 = vld [vmem:[%s4 + $0x58] sm:$0xff]
        %v340 = vld [vmem:[%s4 + $0x60] sm:$0xff]
        %v341 = vld [vmem:[%s4 + $0x68] sm:$0xff]
        %v342 = vld [vmem:[%s4 + $0x70] sm:$0xff]
        %v343 = vld [vmem:[%s4 + $0x78] sm:$0xff]
        %v344 = vld [vmem:[%s4 + $0x80] sm:$0xff]
        %v345 = vld [vmem:[%s4 + $0x88] sm:$0xff]
        %v346 = vld [vmem:[%s4 + $0x90] sm:$0xff]
        %v347 = vld [vmem:[%s4 + $0x98] sm:$0xff]
        %v348 = vld [vmem:[%s4 + $0xa0] sm:$0xff]
        %v349 = vld [vmem:[%s4 + $0xa8] sm:$0xff]
        %v350 = vld [vmem:[%s4 + $0xb0] sm:$0xff]
        %v351 = vld [vmem:[%s4 + $0xb8] sm:$0xff]
        %v352 = vld [vmem:[%s4 + $0xc0] sm:$0xff]
        %v353 = vld [vmem:[%s4 + $0xc8] sm:$0xff]
        %v354 = vld [vmem:[%s4 + $0xd0] sm:$0xff]
        %v355 = vld [vmem:[%s4 + $0xd8] sm:$0xff]
        %v356 = vld [vmem:[%s4 + $0xe0] sm:$0xff]
        %v357 = vld [vmem:[%s4 + $0xe8] sm:$0xff]
        %v358 = vld [vmem:[%s4 + $0xf0] sm:$0xff]
        %v359 = vld [vmem:[%s4 + $0xf8] sm:$0xff]
        %v360 = vld [vmem:[%s5] sm:$0xff]
        %v361 = vld [vmem:[%s5 + $0x8] sm:$0xff]
        %v362 = vld [vmem:[%s5 + $0x10] sm:$0xff]
        %v363 = vld [vmem:[%s5 + $0x18] sm:$0xff]
        %v364 = vld [vmem:[%s320] sm:$0xff]
        %vm365 = vcmask 261120
        %v367 = vsel %vm365, %v325, 0
        %369 = vmatpush.msra.mxu0 0.0
        %370 = vmatpush.msra.mxu0 0.0
        %371 = vmatpush.msra.mxu0 0.0
        %372 = vmatpush.msra.mxu0 0.0
        %373 = vmatpush.msra.mxu0 0.0
        %374 = vmatpush.msra.mxu0 0.0
        %375 = vmatpush.msra.mxu0 0.0
        %376 = vmatpush.msra.mxu0 0.0
        %377 = vmatpush.msra.mxu0 0.0
        %378 = vmatpush.msra.mxu0 0.0
        %379 = vmatpush.msra.mxu0 0.0
        %380 = vmatpush.msra.mxu0 0.0
        %381 = vmatpush.msra.mxu0 %v331
        %382 = vmatpush.msra.mxu0 %v330
        %383 = vmatpush.msra.mxu0 %v329
        %384 = vmatpush.msra.mxu0 %v328
        %385 = vmatmul.f32.gmra.mxu0 %v367
        %v386 = vpop.f32.mrf.mxu0
        %v387 = vadd.f32 0.0, %v386
        %388 = vdwg.mxu0
        %vm389 = vcmp.ne.f32.partialorder %v364, 0.0
        %v390 = vsel %vm389, 1, 0
        %v391 = vcvt.s32.f32 %v390
        %vm392 = vcmask 64512
        %v393 = vsel %vm392, %v391, -inf
        %394 = vmax.xlane.f32.xlu0 %v393
        %v395 = vpop.xlane.xlu0 %394
        %vm396 = vcmp.gt.f32.partialorder %v395, 0.0
        %v397 = vsel %vm396, 1.0, nan
        %v398 = vsel %vm365, %v387, 0.0
        %v399 = vrot.slane %v398, 4
        %v400 = vadd.f32 %v398, %v399
        %v401 = vrot.slane %v400, 2
        %v402 = vadd.f32 %v400, %v401
        %v403 = vrot.slane %v402, 1
        %v404 = vadd.f32 %v402, %v403
        %v405 = vmul.f32 %v397, %v404
        %v406 = vperm.slane %v326, 0
        %v408 = vsel %vm365, %v405, 0
        %410 = vmatpush.msra.mxu0 0.0
        %411 = vmatpush.msra.mxu0 0.0
        %412 = vmatpush.msra.mxu0 0.0
        %413 = vmatpush.msra.mxu0 0.0
        %414 = vmatpush.msra.mxu0 0.0
        %415 = vmatpush.msra.mxu0 0.0
        %416 = vmatpush.msra.mxu0 0.0
        %417 = vmatpush.msra.mxu0 0.0
        %418 = vmatpush.msra.mxu0 0.0
        %419 = vmatpush.msra.mxu0 0.0
        %420 = vmatpush.msra.mxu0 0.0
        %421 = vmatpush.msra.mxu0 0.0
        %422 = vmatpush.msra.mxu0 %v335
        %423 = vmatpush.msra.mxu0 %v334
        %424 = vmatpush.msra.mxu0 %v333
        %425 = vmatpush.msra.mxu0 %v332
        %426 = vmatmul.f32.gmra.mxu0 %v408
        %v427 = vpop.f32.mrf.mxu0
        %v428 = vadd.f32 %v406, %v427
        %429 = vdwg.mxu0
        %v430 = vadd.f32 %v428, %v325
        %v431 = vsel %vm365, %v430, 0.0
        %432 = vadd.xlane.f32.xlu0 %v431
        %v433 = vpop.xlane.xlu0 %432
        %v434 = vrcp.pop 32.0
        %v435 = vmul.f32 32.0, %v434
        %v436 = vsub.f32 1.0, %v435
        %v437 = vmul.f32 %v434, %v436
        %v438 = vadd.f32 %v434, %v437
        %vm439 = vweird.f32 %v434
        %v440 = vsel %vm439, %v434, %v438
        %v441 = vmul.f32 %v433, %v440
        %v442 = vsub.f32 %v430, %v441
        %v443 = vmul.f32 %v442, %v442
        %v444 = vsel %vm365, %v443, 0.0
        %445 = vadd.xlane.f32.xlu0 %v444
        %v446 = vpop.xlane.xlu0 %445
        %v447 = vmul.f32 %v446, %v440
        %v448 = vadd.f32 %v447, 1e-05
        %v449 = vrsqrt.pop %v448
        %v450 = vmul.f32 %v449, %v448
        %v451 = vmul.f32 %v450, %v449
        %v452 = vmul.f32 0.5, %v451
        %v453 = vsub.f32 1.5, %v452
        %v454 = vmul.f32 %v449, %v453
        %vm455 = vweird.f32 %v448
        %vm456 = vweird.f32 %v449
        %vm457 = vmor %vm455, %vm456
        %v458 = vsel %vm457, %v449, %v454
        %v459 = vmul.f32 %v442, %v458
        %v460 = vperm.slane %v326, 2
        %v461 = vmul.f32 %v459, %v460
        %v462 = vperm.slane %v326, 3
        %v463 = vadd.f32 %v461, %v462
        %v464 = vld [vmem:[%s324] sm:$0xff]
        %v466 = vsel %vm365, %v463, 0
        %468 = vmatpush.msra.mxu0 0.0
        %469 = vmatpush.msra.mxu0 0.0
        %470 = vmatpush.msra.mxu0 0.0
        %471 = vmatpush.msra.mxu0 0.0
        %472 = vmatpush.msra.mxu0 0.0
        %473 = vmatpush.msra.mxu0 0.0
        %474 = vmatpush.msra.mxu0 0.0
        %475 = vmatpush.msra.mxu0 0.0
        %476 = vmatpush.msra.mxu0 0.0
        %477 = vmatpush.msra.mxu0 0.0
        %478 = vmatpush.msra.mxu0 0.0
        %479 = vmatpush.msra.mxu0 0.0
        %480 = vmatpush.msra.mxu0 %v339
        %481 = vmatpush.msra.mxu0 %v338
        %482 = vmatpush.msra.mxu0 %v337
        %483 = vmatpush.msra.mxu0 %v336
        %484 = vmatmul.f32.gmra.mxu0 %v466
        %v485 = vpop.f32.mrf.mxu0
        %v486 = vadd.f32 0.0, %v485
        %487 = vdwg.mxu0
        %vm488 = vcmp.ne.f32.partialorder %v464, 0.0
        %v489 = vsel %vm488, 1, 0
        %v490 = vcvt.s32.f32 %v489
        %v491 = vsel %vm392, %v490, -inf
        %492 = vmax.xlane.f32.xlu0 %v491
        %v493 = vpop.xlane.xlu0 %492
        %vm494 = vcmp.gt.f32.partialorder %v493, 0.0
        %v495 = vsel %vm494, 1.0, nan
        %v496 = vsel %vm365, %v486, 0.0
        %v497 = vrot.slane %v496, 4
        %v498 = vadd.f32 %v496, %v497
        %v499 = vrot.slane %v498, 2
        %v500 = vadd.f32 %v498, %v499
        %v501 = vrot.slane %v500, 1
        %v502 = vadd.f32 %v500, %v501
        %v503 = vmul.f32 %v495, %v502
        %v504 = vperm.slane %v326, 1
        %v506 = vsel %vm365, %v503, 0
        %508 = vmatpush.msra.mxu0 0.0
        %509 = vmatpush.msra.mxu0 0.0
        %510 = vmatpush.msra.mxu0 0.0
        %511 = vmatpush.msra.mxu0 0.0
        %512 = vmatpush.msra.mxu0 0.0
        %513 = vmatpush.msra.mxu0 0.0
        %514 = vmatpush.msra.mxu0 0.0
        %515 = vmatpush.msra.mxu0 0.0
        %516 = vmatpush.msra.mxu0 0.0
        %517 = vmatpush.msra.mxu0 0.0
        %518 = vmatpush.msra.mxu0 0.0
        %519 = vmatpush.msra.mxu0 0.0
        %520 = vmatpush.msra.mxu0 %v343
        %521 = vmatpush.msra.mxu0 %v342
        %522 = vmatpush.msra.mxu0 %v341
        %523 = vmatpush.msra.mxu0 %v340
        %524 = vmatmul.f32.gmra.mxu0 %v506
        %v525 = vpop.f32.mrf.mxu0
        %v526 = vadd.f32 %v504, %v525
        %527 = vdwg.mxu0
        %v528 = vadd.f32 %v526, %v463
        %v529 = vsel %vm365, %v528, 0.0
        %530 = vadd.xlane.f32.xlu0 %v529
        %v531 = vpop.xlane.xlu0 %530
        %v532 = vmul.f32 %v531, %v440
        %v533 = vsub.f32 %v528, %v532
        %v534 = vmul.f32 %v533, %v533
        %v535 = vsel %vm365, %v534, 0.0
        %536 = vadd.xlane.f32.xlu0 %v535
        %v537 = vpop.xlane.xlu0 %536
        %v538 = vmul.f32 %v537, %v440
        %v539 = vadd.f32 %v538, 1e-05
        %v540 = vrsqrt.pop %v539
        %v541 = vmul.f32 %v540, %v539
        %v542 = vmul.f32 %v541, %v540
        %v543 = vmul.f32 0.5, %v542
        %v544 = vsub.f32 1.5, %v543
        %v545 = vmul.f32 %v540, %v544
        %vm546 = vweird.f32 %v539
        %vm547 = vweird.f32 %v540
        %vm548 = vmor %vm546, %vm547
        %v549 = vsel %vm548, %v540, %v545
        %v550 = vmul.f32 %v533, %v549
        %v551 = vperm.slane %v326, 4
        %v552 = vmul.f32 %v550, %v551
        %v553 = vperm.slane %v326, 5
        %v554 = vadd.f32 %v552, %v553
        %v555 = vperm.slane %v327, 1
        %v557 = vsel %vm365, %v554, 0
        %559 = vmatpush.msra.mxu0 0.0
        %560 = vmatpush.msra.mxu0 0.0
        %561 = vmatpush.msra.mxu0 0.0
        %562 = vmatpush.msra.mxu0 0.0
        %563 = vmatpush.msra.mxu0 0.0
        %564 = vmatpush.msra.mxu0 0.0
        %565 = vmatpush.msra.mxu0 0.0
        %566 = vmatpush.msra.mxu0 0.0
        %567 = vmatpush.msra.mxu0 0.0
        %568 = vmatpush.msra.mxu0 0.0
        %569 = vmatpush.msra.mxu0 0.0
        %570 = vmatpush.msra.mxu0 0.0
        %571 = vmatpush.msra.mxu0 %v363
        %572 = vmatpush.msra.mxu0 %v362
        %573 = vmatpush.msra.mxu0 %v361
        %574 = vmatpush.msra.mxu0 %v360
        %575 = vmatmul.f32.gmra.mxu0 %v557
        %v576 = vpop.f32.mrf.mxu0
        %v577 = vadd.f32 %v555, %v576
        %578 = vdwg.mxu0
        %v579 = vmax.f32 %v577, 0.0
        %v580 = vperm.slane %v327, 0
        %581 = vmatpush.msra.mxu0 %v359
        %582 = vmatpush.msra.mxu0 %v358
        %583 = vmatpush.msra.mxu0 %v357
        %584 = vmatpush.msra.mxu0 %v356
        %585 = vmatpush.msra.mxu0 %v355
        %586 = vmatpush.msra.mxu0 %v354
        %587 = vmatpush.msra.mxu0 %v353
        %588 = vmatpush.msra.mxu0 %v352
        %589 = vmatpush.msra.mxu0 %v351
        %590 = vmatpush.msra.mxu0 %v350
        %591 = vmatpush.msra.mxu0 %v349
        %592 = vmatpush.msra.mxu0 %v348
        %593 = vmatpush.msra.mxu0 %v347
        %594 = vmatpush.msra.mxu0 %v346
        %595 = vmatpush.msra.mxu0 %v345
        %596 = vmatpush.msra.mxu0 %v344
        %597 = vmatmul.f32.gmra.mxu0 %v579
        %v598 = vpop.f32.mrf.mxu0
        %v599 = vadd.f32 %v580, %v598
        %600 = vdwg.mxu0
        %v601 = vadd.f32 %v599, %v554
        %v602 = vsel %vm365, %v601, 0.0
        %603 = vadd.xlane.f32.xlu0 %v602
        %v604 = vpop.xlane.xlu0 %603
        %v605 = vmul.f32 %v604, %v440
        %v606 = vsub.f32 %v601, %v605
        %v607 = vmul.f32 %v606, %v606
        %v608 = vsel %vm365, %v607, 0.0
        %609 = vadd.xlane.f32.xlu0 %v608
        %v610 = vpop.xlane.xlu0 %609
        %v611 = vmul.f32 %v610, %v440
        %v612 = vadd.f32 %v611, 1e-05
        %v613 = vrsqrt.pop %v612
        %v614 = vmul.f32 %v613, %v612
        %v615 = vmul.f32 %v614, %v613
        %v616 = vmul.f32 0.5, %v615
        %v617 = vsub.f32 1.5, %v616
        %v618 = vmul.f32 %v613, %v617
        %vm619 = vweird.f32 %v612
        %vm620 = vweird.f32 %v613
        %vm621 = vmor %vm619, %vm620
        %v622 = vsel %vm621, %v613, %v618
        %v623 = vmul.f32 %v606, %v622
        %v624 = vperm.slane %v326, 6
        %v625 = vmul.f32 %v623, %v624
        %v626 = vperm.slane %v326, 7
        %v627 = vadd.f32 %v625, %v626
        %628 = vst.msk [vmem:[%s308] sm:$0xff] %vm365, %v627
        %s629 = sand.u32 %s196, 1
        %s630 = scalar_lea.sflag [#allocation3], %s629
        %s631 = sand.u32 %s196, 1
        %s632 = smul.addr %s631, 8
        %s633 = scalar_lea.vmem [#allocation2], %s632
        // Predicated region
        $region49: #{tpu_custom_call.1} parent=47 // pred_check
          %p634 = pneg %p206
        $region50: #{tpu_custom_call.1} parent=47 // pred_check_branch
          %636 = sbr.rel (%p634) target = $region52
        $region51: #{tpu_custom_call.1} parent=47 // pred_region
          %638 = vsyncadd %s630, 0
          %s639 = smul.addr %s21, 8
          %s640 = scalar_lea.hbm %s7, %s639
          %s642 = sshll.u32 %s633, 4
          %s643 = int_to_ptr.vmem [resolvable:$true] %s642
          %s644 = sshll.u32 %s640, 4
          %s645 = int_to_ptr.hbm [resolvable:$true] %s644
          %647 = dma.vmem_to_hbm [thread:$0]  %s643, 128, %s645, %s630
        $region52: #{tpu_custom_call.1} parent=47 // pred_fallthru
          _
      $region48: #{tpu_custom_call.1} parent=5 // pred_fallthru
        _
      %p648 = scmp.le.s32.totalorder 2, %s16
      // Predicated region
      $region53: #{tpu_custom_call.1} parent=5 // pred_check
        %p649 = pneg %p648
      $region54: #{tpu_custom_call.1} parent=5 // pred_check_branch
        %651 = sbr.rel (%p649) target = $region56
      $region55: #{tpu_custom_call.1} parent=5 // pred_region
        %s652 = ssub.s32 %s16, 2
        // Predicated region
        $region57: #{tpu_custom_call.1} parent=55 // pred_check
          %p653 = pneg %p212
        $region58: #{tpu_custom_call.1} parent=55 // pred_check_branch
          %655 = sbr.rel (%p653) target = $region60
        $region59: #{tpu_custom_call.1} parent=55 // pred_region
          %s656 = sand.u32 %s197, 1
          %s657 = scalar_lea.sflag [#allocation3], %s656
          %s658 = sand.u32 %s197, 1
          %s659 = smul.addr %s658, 8
          %s660 = scalar_lea.vmem [#allocation2], %s659
          %662 = dma.done %s657, 128
        $region60: #{tpu_custom_call.1} parent=55 // pred_fallthru
          _
      $region56: #{tpu_custom_call.1} parent=5 // pred_fallthru
        _
    $region6: #{tpu_custom_call.1} parent=1 // loop_footer
      %s20 = sadd.s32 1, %s16
    $region7: #{tpu_custom_call.1} parent=1 // loop_footer_branch
      %15 = sbr.rel target = $region3
    $region8: #{tpu_custom_call.1} parent=1 // loop_exit
      _
    %663 = vsyncpa [#allocation3], 1
    %s664 = scalar_lea.sflag [#allocation3], 1
    %665 = vsyncpa %s664, 1

</llo_original>
